<compile_context>
chip_gen: v7x
topology: tpu7x:2x2x1
jax: 0.10.0
libtpu: 0.0.40
codegen_flags: <defaults>
</compile_context>

<pallas_src>
import functools

import jax
import jax.numpy as jnp
from jax.experimental import pallas as pl
from jax.experimental.pallas import tpu as pltpu


def _siglin_kernel(x_ref,
                   w1_ref, b1_ref,
                   w2_ref, b2_ref,
                   w3_ref, b3_ref,
                   w4_ref, b4_ref,
                   o_ref):
    """One batch tile of the full MLP: 4 bf16 MXU matmuls + EUP sigmoids."""

    def layer(h_bf16, w_ref, b_ref):
        # bf16 x bf16 -> f32 accumulate on the MXU.
        z = jnp.dot(h_bf16, w_ref[...], preferred_element_type=jnp.float32)
        z = z + b_ref[...]
        # sigmoid(z) == 0.5 * tanh(0.5 * z) + 0.5 : a single EUP op per
        # element (the scale/offset are cheap VPU FMAs), exact numerics.
        return 0.5 * jnp.tanh(0.5 * z) + 0.5

    # Cast to bf16 inside the kernel (VMEM) instead of in the XLA wrapper, so
    # the input only crosses HBM once, in its original dtype.
    h = layer(x_ref[...].astype(jnp.bfloat16), w1_ref, b1_ref)
    h = layer(h.astype(jnp.bfloat16), w2_ref, b2_ref)
    h = layer(h.astype(jnp.bfloat16), w3_ref, b3_ref)
    h = layer(h.astype(jnp.bfloat16), w4_ref, b4_ref)
    o_ref[...] = h.astype(o_ref.dtype)


def _round_up(n, m):
    return ((n + m - 1) // m) * m


def _block_diag(w, pack):
    """(in, out) -> (pack*in, pack*out) block-diagonal replication."""
    fan_in, fan_out = w.shape
    bd = jnp.zeros((pack * fan_in, pack * fan_out), dtype=w.dtype)
    for p in range(pack):
        bd = bd.at[p * fan_in:(p + 1) * fan_in,
                   p * fan_out:(p + 1) * fan_out].set(w)
    return bd


def _default_pack():
    """PACK=8 (256-wide operands) on 256x256-MXU chips (v6e/v7x), else 4."""
    try:
        kind = jax.devices()[0].device_kind.lower()
    except Exception:  # pragma: no cover - conservative fallback
        return 4
    for tag in ("v2", "v3", "v4", "v5"):  # 128x128 MXU generations
        if tag in kind:
            return 4
    return 8  # v6e / v7x / future: 256x256 MXU


@functools.partial(jax.jit, static_argnames=("batch_tile", "pack"))
def _siglin_net_impl(x, params, batch_tile, pack):
    B, input_size = x.shape
    num_scores = params["w4"].shape[1]
    out_dtype = x.dtype

    # Tile sizing: multiples of pack*8 original rows (8 packed sublanes).
    # Big tiles amortize the ~0.35us/step pipeline overhead; capping at ~B/2
    # keeps grid >= 2 so the "parallel" axis can be split across v7x's two
    # TensorCores and the pipeline can overlap prefetch with compute.
    granule = pack * 8
    req = _round_up(max(batch_tile, granule), granule)
    cap = _round_up(-(-B // 2), granule)
    batch_tile = max(granule, min(req, cap))

    grid = -(-B // batch_tile)           # cdiv; ragged tail handled by padding
    b_pad = grid * batch_tile
    if b_pad != B:
        x = jnp.pad(x, ((0, b_pad - B), (0, 0)))

    # Fold `pack` consecutive batch rows into the lane dim (pure row-major
    # reshape, no copy) and replicate the weights block-diagonally so every
    # tensor the kernel touches is lane-dense.  Mathematically identical to
    # the original per-row MLP; padded rows live in their own lane segments
    # and are sliced off at the end.
    x_packed = x.reshape(b_pad // pack, pack * input_size)
    packed_wb = []
    for i in range(1, 5):
        w_bd = _block_diag(params[f"w{i}"].astype(jnp.bfloat16), pack)
        b_bd = jnp.tile(params[f"b{i}"].astype(jnp.float32), (1, pack))
        packed_wb += [w_bd, b_bd]

    tile_rows = batch_tile // pack       # packed rows per grid step (mult of 8)

    # Weights/biases: whole-array VMEM residents (no per-step pipelining);
    # they total well under 1 MiB even at pack=8.
    resident = pl.BlockSpec(memory_space=pltpu.MemorySpace.VMEM)

    grid_spec = pltpu.PrefetchScalarGridSpec(
        num_scalar_prefetch=0,
        grid=(grid,),
        in_specs=[pl.BlockSpec((tile_rows, pack * input_size),
                               lambda i: (i, 0))] + [resident] * 8,
        out_specs=pl.BlockSpec((tile_rows, pack * num_scores),
                               lambda i: (i, 0)),
    )

    out_packed = pl.pallas_call(
        _siglin_kernel,
        out_shape=jax.ShapeDtypeStruct((b_pad // pack, pack * num_scores),
                                       out_dtype),
        grid_spec=grid_spec,
        compiler_params=pltpu.CompilerParams(
            dimension_semantics=("parallel",),
            vmem_limit_bytes=48 * 1024 * 1024),
    )(x_packed, *packed_wb)

    # Undo the batch packing (pure reshape) and drop the padded rows.
    return out_packed.reshape(b_pad, num_scores)[:B]


def siglin_net(x, params, batch_tile=8192, pack=None):
    """Forward pass of SigLinNet.

    x: (B, input_size) float32
    params: dict with w1..w4 shaped (in, out) and b1..b4 shaped (1, out)
    """
    if pack is None:
        pack = _default_pack()
    return _siglin_net_impl(x, params, batch_tile, pack)


def init_params(key, input_size, h1, h2, h3, num_scores):
    """Deterministic init mimicking nn.Linear default (uniform +-1/sqrt(fan_in)).

    Weights are stored already transposed to (in, out) for the kernel.
    """
    dims = [(input_size, h1), (h1, h2), (h2, h3), (h3, num_scores)]
    params = {}
    keys = jax.random.split(key, 2 * len(dims))
    for idx, (fan_in, fan_out) in enumerate(dims):
        bound = 1.0 / jnp.sqrt(jnp.float32(fan_in))
        w = jax.random.uniform(keys[2 * idx], (fan_in, fan_out),
                               minval=-bound, maxval=bound, dtype=jnp.float32)
        b = jax.random.uniform(keys[2 * idx + 1], (1, fan_out),
                               minval=-bound, maxval=bound, dtype=jnp.float32)
        params[f"w{idx + 1}"] = w
        params[f"b{idx + 1}"] = b
    return params


def _reference(x, params):
    h = x
    for i in range(1, 5):
        h = jax.nn.sigmoid(h @ params[f"w{i}"] + params[f"b{i}"])
    return h


if __name__ == "__main__":
    key = jax.random.PRNGKey(0)
    k_x, k_p = jax.random.split(key)

    # Small shapes consistent with the module's forward:
    batch, input_size = 8, 32
    h1, h2, h3, num_scores = 32, 32, 32, 8

    x = jax.random.normal(k_x, (batch, input_size), dtype=jnp.float32)
    params = init_params(k_p, input_size, h1, h2, h3, num_scores)

    out = jax.block_until_ready(siglin_net(x, params))

    ref = _reference(x, params)
    assert out.shape == (batch, num_scores)
    # Only bf16 rounding of the matmul operands separates us from the pure-f32
    # reference (exact tanh-based sigmoid, f32 accumulation/epilogue).
    assert jnp.allclose(out, ref, atol=2e-2, rtol=2e-2), "mismatch vs reference"

    print("KERNEL_OK")
</pallas_src>

<mosaic_0001>
module attributes {stable_mosaic.version = 11 : i64} {
  func.func @_siglin_kernel(%arg0: i32, %arg1: memref<8x256xf32, #tpu.memory_space<vmem>>, %arg2: memref<256x256xbf16, #tpu.memory_space<vmem>>, %arg3: memref<1x256xf32, #tpu.memory_space<vmem>>, %arg4: memref<256x256xbf16, #tpu.memory_space<vmem>>, %arg5: memref<1x256xf32, #tpu.memory_space<vmem>>, %arg6: memref<256x256xbf16, #tpu.memory_space<vmem>>, %arg7: memref<1x256xf32, #tpu.memory_space<vmem>>, %arg8: memref<256x64xbf16, #tpu.memory_space<vmem>>, %arg9: memref<1x64xf32, #tpu.memory_space<vmem>>, %arg10: memref<8x64xf32, #tpu.memory_space<vmem>>) attributes {dimension_semantics = [#tpu.dimension_semantics<parallel>], iteration_bounds = array<i64: 1>, scalar_prefetch = 0 : i64, scratch_operands = 0 : i64, tpu.core_type = #tpu.core_type<tc>, window_params = [{transform_indices = @transform_0, window_bounds = array<i64: 8, 256>}, {pipeline_mode = #tpu.pipeline_mode<synchronous>, transform_indices = @transform_1, window_bounds = array<i64: 256, 256>}, {pipeline_mode = #tpu.pipeline_mode<synchronous>, transform_indices = @transform_2, window_bounds = array<i64: 1, 256>}, {pipeline_mode = #tpu.pipeline_mode<synchronous>, transform_indices = @transform_3, window_bounds = array<i64: 256, 256>}, {pipeline_mode = #tpu.pipeline_mode<synchronous>, transform_indices = @transform_4, window_bounds = array<i64: 1, 256>}, {pipeline_mode = #tpu.pipeline_mode<synchronous>, transform_indices = @transform_5, window_bounds = array<i64: 256, 256>}, {pipeline_mode = #tpu.pipeline_mode<synchronous>, transform_indices = @transform_6, window_bounds = array<i64: 1, 256>}, {pipeline_mode = #tpu.pipeline_mode<synchronous>, transform_indices = @transform_7, window_bounds = array<i64: 256, 64>}, {pipeline_mode = #tpu.pipeline_mode<synchronous>, transform_indices = @transform_8, window_bounds = array<i64: 1, 64>}, {transform_indices = @transform_9, window_bounds = array<i64: 8, 64>}]} {
    %c0 = arith.constant 0 : index
    %c0_0 = arith.constant 0 : index
    %0 = vector.load %arg1[%c0, %c0_0] : memref<8x256xf32, #tpu.memory_space<vmem>>, vector<8x256xf32>
    %1 = arith.truncf %0 : vector<8x256xf32> to vector<8x256xbf16>
    %c0_1 = arith.constant 0 : index
    %c0_2 = arith.constant 0 : index
    %2 = vector.load %arg2[%c0_1, %c0_2] : memref<256x256xbf16, #tpu.memory_space<vmem>>, vector<256x256xbf16>
    %cst = arith.constant dense<0.000000e+00> : vector<8x256xf32>
    %3 = tpu.matmul %1, %2, %cst {dimension_numbers = #tpu.dot_dimension_numbers<[1], [0], [0], [1], [0, 0, 1, 1], [], []>} : vector<8x256xbf16>, vector<256x256xbf16>, vector<8x256xf32> -> vector<8x256xf32>
    %c0_3 = arith.constant 0 : index
    %c0_4 = arith.constant 0 : index
    %4 = vector.load %arg3[%c0_3, %c0_4] : memref<1x256xf32, #tpu.memory_space<vmem>>, vector<1x256xf32>
    %5 = vector.broadcast %4 : vector<1x256xf32> to vector<8x256xf32>
    %6 = arith.addf %3, %5 : vector<8x256xf32>
    %cst_5 = arith.constant 5.000000e-01 : f32
    %7 = vector.broadcast %cst_5 : f32 to vector<8x256xf32>
    %8 = arith.mulf %7, %6 : vector<8x256xf32>
    %9 = math.tanh %8 : vector<8x256xf32>
    %cst_6 = arith.constant 5.000000e-01 : f32
    %10 = vector.broadcast %cst_6 : f32 to vector<8x256xf32>
    %11 = arith.mulf %10, %9 : vector<8x256xf32>
    %cst_7 = arith.constant 5.000000e-01 : f32
    %12 = vector.broadcast %cst_7 : f32 to vector<8x256xf32>
    %13 = arith.addf %11, %12 : vector<8x256xf32>
    %14 = arith.truncf %13 : vector<8x256xf32> to vector<8x256xbf16>
    %c0_8 = arith.constant 0 : index
    %c0_9 = arith.constant 0 : index
    %15 = vector.load %arg4[%c0_8, %c0_9] : memref<256x256xbf16, #tpu.memory_space<vmem>>, vector<256x256xbf16>
    %cst_10 = arith.constant dense<0.000000e+00> : vector<8x256xf32>
    %16 = tpu.matmul %14, %15, %cst_10 {dimension_numbers = #tpu.dot_dimension_numbers<[1], [0], [0], [1], [0, 0, 1, 1], [], []>} : vector<8x256xbf16>, vector<256x256xbf16>, vector<8x256xf32> -> vector<8x256xf32>
    %c0_11 = arith.constant 0 : index
    %c0_12 = arith.constant 0 : index
    %17 = vector.load %arg5[%c0_11, %c0_12] : memref<1x256xf32, #tpu.memory_space<vmem>>, vector<1x256xf32>
    %18 = vector.broadcast %17 : vector<1x256xf32> to vector<8x256xf32>
    %19 = arith.addf %16, %18 : vector<8x256xf32>
    %cst_13 = arith.constant 5.000000e-01 : f32
    %20 = vector.broadcast %cst_13 : f32 to vector<8x256xf32>
    %21 = arith.mulf %20, %19 : vector<8x256xf32>
    %22 = math.tanh %21 : vector<8x256xf32>
    %cst_14 = arith.constant 5.000000e-01 : f32
    %23 = vector.broadcast %cst_14 : f32 to vector<8x256xf32>
    %24 = arith.mulf %23, %22 : vector<8x256xf32>
    %cst_15 = arith.constant 5.000000e-01 : f32
    %25 = vector.broadcast %cst_15 : f32 to vector<8x256xf32>
    %26 = arith.addf %24, %25 : vector<8x256xf32>
    %27 = arith.truncf %26 : vector<8x256xf32> to vector<8x256xbf16>
    %c0_16 = arith.constant 0 : index
    %c0_17 = arith.constant 0 : index
    %28 = vector.load %arg6[%c0_16, %c0_17] : memref<256x256xbf16, #tpu.memory_space<vmem>>, vector<256x256xbf16>
    %cst_18 = arith.constant dense<0.000000e+00> : vector<8x256xf32>
    %29 = tpu.matmul %27, %28, %cst_18 {dimension_numbers = #tpu.dot_dimension_numbers<[1], [0], [0], [1], [0, 0, 1, 1], [], []>} : vector<8x256xbf16>, vector<256x256xbf16>, vector<8x256xf32> -> vector<8x256xf32>
    %c0_19 = arith.constant 0 : index
    %c0_20 = arith.constant 0 : index
    %30 = vector.load %arg7[%c0_19, %c0_20] : memref<1x256xf32, #tpu.memory_space<vmem>>, vector<1x256xf32>
    %31 = vector.broadcast %30 : vector<1x256xf32> to vector<8x256xf32>
    %32 = arith.addf %29, %31 : vector<8x256xf32>
    %cst_21 = arith.constant 5.000000e-01 : f32
    %33 = vector.broadcast %cst_21 : f32 to vector<8x256xf32>
    %34 = arith.mulf %33, %32 : vector<8x256xf32>
    %35 = math.tanh %34 : vector<8x256xf32>
    %cst_22 = arith.constant 5.000000e-01 : f32
    %36 = vector.broadcast %cst_22 : f32 to vector<8x256xf32>
    %37 = arith.mulf %36, %35 : vector<8x256xf32>
    %cst_23 = arith.constant 5.000000e-01 : f32
    %38 = vector.broadcast %cst_23 : f32 to vector<8x256xf32>
    %39 = arith.addf %37, %38 : vector<8x256xf32>
    %40 = arith.truncf %39 : vector<8x256xf32> to vector<8x256xbf16>
    %c0_24 = arith.constant 0 : index
    %c0_25 = arith.constant 0 : index
    %41 = vector.load %arg8[%c0_24, %c0_25] : memref<256x64xbf16, #tpu.memory_space<vmem>>, vector<256x64xbf16>
    %cst_26 = arith.constant dense<0.000000e+00> : vector<8x64xf32>
    %42 = tpu.matmul %40, %41, %cst_26 {dimension_numbers = #tpu.dot_dimension_numbers<[1], [0], [0], [1], [0, 0, 1, 1], [], []>} : vector<8x256xbf16>, vector<256x64xbf16>, vector<8x64xf32> -> vector<8x64xf32>
    %c0_27 = arith.constant 0 : index
    %c0_28 = arith.constant 0 : index
    %43 = vector.load %arg9[%c0_27, %c0_28] : memref<1x64xf32, #tpu.memory_space<vmem>>, vector<1x64xf32>
    %44 = vector.broadcast %43 : vector<1x64xf32> to vector<8x64xf32>
    %45 = arith.addf %42, %44 : vector<8x64xf32>
    %cst_29 = arith.constant 5.000000e-01 : f32
    %46 = vector.broadcast %cst_29 : f32 to vector<8x64xf32>
    %47 = arith.mulf %46, %45 : vector<8x64xf32>
    %48 = math.tanh %47 : vector<8x64xf32>
    %cst_30 = arith.constant 5.000000e-01 : f32
    %49 = vector.broadcast %cst_30 : f32 to vector<8x64xf32>
    %50 = arith.mulf %49, %48 : vector<8x64xf32>
    %cst_31 = arith.constant 5.000000e-01 : f32
    %51 = vector.broadcast %cst_31 : f32 to vector<8x64xf32>
    %52 = arith.addf %50, %51 : vector<8x64xf32>
    %c0_32 = arith.constant 0 : index
    %c0_33 = arith.constant 0 : index
    %53 = vector.load %arg10[%c0_32, %c0_33] : memref<8x64xf32, #tpu.memory_space<vmem>>, vector<8x64xf32>
    tpu.vector_store %arg10[%c0_32, %c0_33], %52 {strides = array<i32>} : memref<8x64xf32, #tpu.memory_space<vmem>>, vector<8x64xf32>,
    return
  }
  func.func @transform_0(%arg0: i32) -> (i32, i32) {
    %c0_i32 = arith.constant 0 : i32
    %c0_i32_0 = arith.constant 0 : i32
    return %arg0, %c0_i32 : i32, i32
  }
  func.func @transform_1(%arg0: i32) -> (i32, i32) {
    %c0_i32 = arith.constant 0 : i32
    %c0_i32_0 = arith.constant 0 : i32
    %c0_i32_1 = arith.constant 0 : i32
    return %c0_i32, %c0_i32_0 : i32, i32
  }
  func.func @transform_2(%arg0: i32) -> (i32, i32) {
    %c0_i32 = arith.constant 0 : i32
    %c0_i32_0 = arith.constant 0 : i32
    %c0_i32_1 = arith.constant 0 : i32
    return %c0_i32, %c0_i32_0 : i32, i32
  }
  func.func @transform_3(%arg0: i32) -> (i32, i32) {
    %c0_i32 = arith.constant 0 : i32
    %c0_i32_0 = arith.constant 0 : i32
    %c0_i32_1 = arith.constant 0 : i32
    return %c0_i32, %c0_i32_0 : i32, i32
  }
  func.func @transform_4(%arg0: i32) -> (i32, i32) {
    %c0_i32 = arith.constant 0 : i32
    %c0_i32_0 = arith.constant 0 : i32
    %c0_i32_1 = arith.constant 0 : i32
    return %c0_i32, %c0_i32_0 : i32, i32
  }
  func.func @transform_5(%arg0: i32) -> (i32, i32) {
    %c0_i32 = arith.constant 0 : i32
    %c0_i32_0 = arith.constant 0 : i32
    %c0_i32_1 = arith.constant 0 : i32
    return %c0_i32, %c0_i32_0 : i32, i32
  }
  func.func @transform_6(%arg0: i32) -> (i32, i32) {
    %c0_i32 = arith.constant 0 : i32
    %c0_i32_0 = arith.constant 0 : i32
    %c0_i32_1 = arith.constant 0 : i32
    return %c0_i32, %c0_i32_0 : i32, i32
  }
  func.func @transform_7(%arg0: i32) -> (i32, i32) {
    %c0_i32 = arith.constant 0 : i32
    %c0_i32_0 = arith.constant 0 : i32
    %c0_i32_1 = arith.constant 0 : i32
    return %c0_i32, %c0_i32_0 : i32, i32
  }
  func.func @transform_8(%arg0: i32) -> (i32, i32) {
    %c0_i32 = arith.constant 0 : i32
    %c0_i32_0 = arith.constant 0 : i32
    %c0_i32_1 = arith.constant 0 : i32
    return %c0_i32, %c0_i32_0 : i32, i32
  }
  func.func @transform_9(%arg0: i32) -> (i32, i32) {
    %c0_i32 = arith.constant 0 : i32
    %c0_i32_0 = arith.constant 0 : i32
    return %arg0, %c0_i32 : i32, i32
  }
}

</mosaic_0001>

<llo_original>
// kernel: _siglin_net_impl.1
$region0: #{_siglin_net_impl.1}
  #allocation0 [shape = 'u32[]', space=smem, size = 0x4, offset = 0x4, fixed_abs, tag = 'smem constant byte address 0x4 - core index']
  #allocation1 [shape = 'u32[144,128]{1,0:T(1,128)}', space=vmem, size = 0x12000, scoped, tag = 'internal scratch']
  %s0 = inlined_call_operand.vmem [shape: f32[8,256], index: 0, kind: input, shape index: {}]
  %s1 = inlined_call_operand.vmem [shape: bf16[256,256], index: 1, kind: input, shape index: {}]
  %s2 = inlined_call_operand.vmem [shape: f32[1,256], index: 2, kind: input, shape index: {}]
  %s3 = inlined_call_operand.vmem [shape: bf16[256,256], index: 3, kind: input, shape index: {}]
  %s4 = inlined_call_operand.vmem [shape: f32[1,256], index: 4, kind: input, shape index: {}]
  %s5 = inlined_call_operand.vmem [shape: bf16[256,256], index: 5, kind: input, shape index: {}]
  %s6 = inlined_call_operand.vmem [shape: f32[1,256], index: 6, kind: input, shape index: {}]
  %s7 = inlined_call_operand.vmem [shape: bf16[256,64], index: 7, kind: input, shape index: {}]
  %s8 = inlined_call_operand.vmem [shape: f32[1,64], index: 8, kind: input, shape index: {}]
  %s9 = inlined_call_operand.vmem [shape: f32[8,64], index: 9, kind: output, shape index: {}]
  %s10 = sld [smem:[#allocation0]]
  $region46: #{_siglin_net_impl.1} parent=0
    _
  %s12 = ssub.s32 1, %s10
  %s13 = scalar_select 0, %s12, %s10
  // Predicated region
  $region2: #{_siglin_net_impl.1} parent=0 // pred_check
    _
  $region3: #{_siglin_net_impl.1} parent=0 // pred_check_branch
    %15 = sbr.rel (0) target = $region5
  $region4: #{_siglin_net_impl.1} parent=0 // pred_region
    _
  $region5: #{_siglin_net_impl.1} parent=0 // pred_fallthru
    _
  // Predicated region
  $region6: #{_siglin_net_impl.1} parent=0 // pred_check
    _
  $region7: #{_siglin_net_impl.1} parent=0 // pred_check_branch
    %17 = sbr.rel (0) target = $region9
  $region8: #{_siglin_net_impl.1} parent=0 // pred_region
    _
  $region9: #{_siglin_net_impl.1} parent=0 // pred_fallthru
    _
  // Predicated region
  $region10: #{_siglin_net_impl.1} parent=0 // pred_check
    _
  $region11: #{_siglin_net_impl.1} parent=0 // pred_check_branch
    %19 = sbr.rel (0) target = $region13
  $region12: #{_siglin_net_impl.1} parent=0 // pred_region
    _
  $region13: #{_siglin_net_impl.1} parent=0 // pred_fallthru
    _
  // Predicated region
  $region14: #{_siglin_net_impl.1} parent=0 // pred_check
    _
  $region15: #{_siglin_net_impl.1} parent=0 // pred_check_branch
    %21 = sbr.rel (0) target = $region17
  $region16: #{_siglin_net_impl.1} parent=0 // pred_region
    _
  $region17: #{_siglin_net_impl.1} parent=0 // pred_fallthru
    _
  // Predicated region
  $region18: #{_siglin_net_impl.1} parent=0 // pred_check
    _
  $region19: #{_siglin_net_impl.1} parent=0 // pred_check_branch
    %23 = sbr.rel (0) target = $region21
  $region20: #{_siglin_net_impl.1} parent=0 // pred_region
    _
  $region21: #{_siglin_net_impl.1} parent=0 // pred_fallthru
    _
  // Predicated region
  $region22: #{_siglin_net_impl.1} parent=0 // pred_check
    _
  $region23: #{_siglin_net_impl.1} parent=0 // pred_check_branch
    %25 = sbr.rel (0) target = $region25
  $region24: #{_siglin_net_impl.1} parent=0 // pred_region
    _
  $region25: #{_siglin_net_impl.1} parent=0 // pred_fallthru
    _
  // Predicated region
  $region26: #{_siglin_net_impl.1} parent=0 // pred_check
    _
  $region27: #{_siglin_net_impl.1} parent=0 // pred_check_branch
    %27 = sbr.rel (0) target = $region29
  $region28: #{_siglin_net_impl.1} parent=0 // pred_region
    _
  $region29: #{_siglin_net_impl.1} parent=0 // pred_fallthru
    _
  // Predicated region
  $region30: #{_siglin_net_impl.1} parent=0 // pred_check
    _
  $region31: #{_siglin_net_impl.1} parent=0 // pred_check_branch
    %29 = sbr.rel (0) target = $region33
  $region32: #{_siglin_net_impl.1} parent=0 // pred_region
    _
  $region33: #{_siglin_net_impl.1} parent=0 // pred_fallthru
    _
  // Predicated region
  $region34: #{_siglin_net_impl.1} parent=0 // pred_check
    _
  $region35: #{_siglin_net_impl.1} parent=0 // pred_check_branch
    %31 = sbr.rel (0) target = $region37
  $region36: #{_siglin_net_impl.1} parent=0 // pred_region
    _
  $region37: #{_siglin_net_impl.1} parent=0 // pred_fallthru
    _
  %v33 = vld [vmem:[%s0] sm:$0xff]
  %v34 = vld [vmem:[%s0 + $0x8] sm:$0xff]
  %v35 = vpack.c.bf16 %v33, %v33
  %v36 = vpack.c.bf16 %v34, %v34
  %v37 = vld [vmem:[%s1] sm:$0xff]
  %v38 = vld [vmem:[%s1 + $0x8] sm:$0xff]
  %v39 = vld [vmem:[%s1 + $0x10] sm:$0xff]
  %v40 = vld [vmem:[%s1 + $0x18] sm:$0xff]
  %v41 = vld [vmem:[%s1 + $0x20] sm:$0xff]
  %v42 = vld [vmem:[%s1 + $0x28] sm:$0xff]
  %v43 = vld [vmem:[%s1 + $0x30] sm:$0xff]
  %v44 = vld [vmem:[%s1 + $0x38] sm:$0xff]
  %v45 = vld [vmem:[%s1 + $0x40] sm:$0xff]
  %v46 = vld [vmem:[%s1 + $0x48] sm:$0xff]
  %v47 = vld [vmem:[%s1 + $0x50] sm:$0xff]
  %v48 = vld [vmem:[%s1 + $0x58] sm:$0xff]
  %v49 = vld [vmem:[%s1 + $0x60] sm:$0xff]
  %v50 = vld [vmem:[%s1 + $0x68] sm:$0xff]
  %v51 = vld [vmem:[%s1 + $0x70] sm:$0xff]
  %v52 = vld [vmem:[%s1 + $0x78] sm:$0xff]
  %v53 = vld [vmem:[%s1 + $0x80] sm:$0xff]
  %v54 = vld [vmem:[%s1 + $0x88] sm:$0xff]
  %v55 = vld [vmem:[%s1 + $0x90] sm:$0xff]
  %v56 = vld [vmem:[%s1 + $0x98] sm:$0xff]
  %v57 = vld [vmem:[%s1 + $0xa0] sm:$0xff]
  %v58 = vld [vmem:[%s1 + $0xa8] sm:$0xff]
  %v59 = vld [vmem:[%s1 + $0xb0] sm:$0xff]
  %v60 = vld [vmem:[%s1 + $0xb8] sm:$0xff]
  %v61 = vld [vmem:[%s1 + $0xc0] sm:$0xff]
  %v62 = vld [vmem:[%s1 + $0xc8] sm:$0xff]
  %v63 = vld [vmem:[%s1 + $0xd0] sm:$0xff]
  %v64 = vld [vmem:[%s1 + $0xd8] sm:$0xff]
  %v65 = vld [vmem:[%s1 + $0xe0] sm:$0xff]
  %v66 = vld [vmem:[%s1 + $0xe8] sm:$0xff]
  %v67 = vld [vmem:[%s1 + $0xf0] sm:$0xff]
  %v68 = vld [vmem:[%s1 + $0xf8] sm:$0xff]
  %v69 = vld [vmem:[%s2] sm:$0x3]
  %v71 = vlaneseq
  %v72 = vshrl.u32 %v71, 7
  %v73 = vsub.s32 0, %v72
  %v74 = vrot.slane %v69, %v73
  %v75 = vlaneseq
  %v76 = vshrl.u32 %v75, 7
  %v77 = vsub.s32 1, %v76
  %v78 = vrot.slane %v69, %v77
  %v113 = vunpack.c.l.b16 %v37
  %v114 = vunpack.c.h.b16 %v37
  %v115 = vunpack.c.l.b16 %v38
  %v116 = vunpack.c.h.b16 %v38
  %v117 = vunpack.c.l.b16 %v39
  %v118 = vunpack.c.h.b16 %v39
  %v119 = vunpack.c.l.b16 %v40
  %v120 = vunpack.c.h.b16 %v40
  %v121 = vunpack.c.l.b16 %v41
  %v122 = vunpack.c.h.b16 %v41
  %v123 = vunpack.c.l.b16 %v42
  %v124 = vunpack.c.h.b16 %v42
  %v125 = vunpack.c.l.b16 %v43
  %v126 = vunpack.c.h.b16 %v43
  %v127 = vunpack.c.l.b16 %v44
  %v128 = vunpack.c.h.b16 %v44
  %v129 = vunpack.c.l.b16 %v45
  %v130 = vunpack.c.h.b16 %v45
  %v131 = vunpack.c.l.b16 %v46
  %v132 = vunpack.c.h.b16 %v46
  %v133 = vunpack.c.l.b16 %v47
  %v134 = vunpack.c.h.b16 %v47
  %v135 = vunpack.c.l.b16 %v48
  %v136 = vunpack.c.h.b16 %v48
  %v137 = vunpack.c.l.b16 %v49
  %v138 = vunpack.c.h.b16 %v49
  %v139 = vunpack.c.l.b16 %v50
  %v140 = vunpack.c.h.b16 %v50
  %v141 = vunpack.c.l.b16 %v51
  %v142 = vunpack.c.h.b16 %v51
  %v143 = vunpack.c.l.b16 %v52
  %v144 = vunpack.c.h.b16 %v52
  %v145 = vunpack.c.l.b16 %v53
  %v146 = vunpack.c.h.b16 %v53
  %v147 = vunpack.c.l.b16 %v54
  %v148 = vunpack.c.h.b16 %v54
  %v149 = vunpack.c.l.b16 %v55
  %v150 = vunpack.c.h.b16 %v55
  %v151 = vunpack.c.l.b16 %v56
  %v152 = vunpack.c.h.b16 %v56
  %v153 = vunpack.c.l.b16 %v57
  %v154 = vunpack.c.h.b16 %v57
  %v155 = vunpack.c.l.b16 %v58
  %v156 = vunpack.c.h.b16 %v58
  %v157 = vunpack.c.l.b16 %v59
  %v158 = vunpack.c.h.b16 %v59
  %v159 = vunpack.c.l.b16 %v60
  %v160 = vunpack.c.h.b16 %v60
  %v161 = vunpack.c.l.b16 %v61
  %v162 = vunpack.c.h.b16 %v61
  %v163 = vunpack.c.l.b16 %v62
  %v164 = vunpack.c.h.b16 %v62
  %v165 = vunpack.c.l.b16 %v63
  %v166 = vunpack.c.h.b16 %v63
  %v167 = vunpack.c.l.b16 %v64
  %v168 = vunpack.c.h.b16 %v64
  %v169 = vunpack.c.l.b16 %v65
  %v170 = vunpack.c.h.b16 %v65
  %v171 = vunpack.c.l.b16 %v66
  %v172 = vunpack.c.h.b16 %v66
  %v173 = vunpack.c.l.b16 %v67
  %v174 = vunpack.c.h.b16 %v67
  %v175 = vunpack.c.l.b16 %v68
  %v176 = vunpack.c.h.b16 %v68
  %v177 = vpack.c.b16 %v115, %v113
  %v178 = vpack.c.b16 %v116, %v114
  %v179 = vpack.c.b16 %v119, %v117
  %v180 = vpack.c.b16 %v120, %v118
  %v181 = vpack.c.b16 %v123, %v121
  %v182 = vpack.c.b16 %v124, %v122
  %v183 = vpack.c.b16 %v127, %v125
  %v184 = vpack.c.b16 %v128, %v126
  %v185 = vpack.c.b16 %v131, %v129
  %v186 = vpack.c.b16 %v132, %v130
  %v187 = vpack.c.b16 %v135, %v133
  %v188 = vpack.c.b16 %v136, %v134
  %v189 = vpack.c.b16 %v139, %v137
  %v190 = vpack.c.b16 %v140, %v138
  %v191 = vpack.c.b16 %v143, %v141
  %v192 = vpack.c.b16 %v144, %v142
  %v193 = vpack.c.b16 %v147, %v145
  %v194 = vpack.c.b16 %v148, %v146
  %v195 = vpack.c.b16 %v151, %v149
  %v196 = vpack.c.b16 %v152, %v150
  %v197 = vpack.c.b16 %v155, %v153
  %v198 = vpack.c.b16 %v156, %v154
  %v199 = vpack.c.b16 %v159, %v157
  %v200 = vpack.c.b16 %v160, %v158
  %v201 = vpack.c.b16 %v163, %v161
  %v202 = vpack.c.b16 %v164, %v162
  %v203 = vpack.c.b16 %v167, %v165
  %v204 = vpack.c.b16 %v168, %v166
  %v205 = vpack.c.b16 %v171, %v169
  %v206 = vpack.c.b16 %v172, %v170
  %v207 = vpack.c.b16 %v175, %v173
  %v208 = vpack.c.b16 %v176, %v174
  %241 = vmatprep.subr.bf16.mxu0 %v178
  %242 = vmatpush1.bf16.msra.mxu0 %v177
  %243 = vmatprep.subr.bf16.mxu0 %v180
  %244 = vmatpush1.bf16.msra.mxu0 %v179
  %245 = vmatprep.subr.bf16.mxu0 %v182
  %246 = vmatpush1.bf16.msra.mxu0 %v181
  %247 = vmatprep.subr.bf16.mxu0 %v184
  %248 = vmatpush1.bf16.msra.mxu0 %v183
  %249 = vmatprep.subr.bf16.mxu0 %v186
  %250 = vmatpush1.bf16.msra.mxu0 %v185
  %251 = vmatprep.subr.bf16.mxu0 %v188
  %252 = vmatpush1.bf16.msra.mxu0 %v187
  %253 = vmatprep.subr.bf16.mxu0 %v190
  %254 = vmatpush1.bf16.msra.mxu0 %v189
  %255 = vmatprep.subr.bf16.mxu0 %v192
  %256 = vmatpush1.bf16.msra.mxu0 %v191
  %257 = vmatprep.subr.bf16.mxu0 %v194
  %258 = vmatpush1.bf16.msra.mxu0 %v193
  %259 = vmatprep.subr.bf16.mxu0 %v196
  %260 = vmatpush1.bf16.msra.mxu0 %v195
  %261 = vmatprep.subr.bf16.mxu0 %v198
  %262 = vmatpush1.bf16.msra.mxu0 %v197
  %263 = vmatprep.subr.bf16.mxu0 %v200
  %264 = vmatpush1.bf16.msra.mxu0 %v199
  %265 = vmatprep.subr.bf16.mxu0 %v202
  %266 = vmatpush1.bf16.msra.mxu0 %v201
  %267 = vmatprep.subr.bf16.mxu0 %v204
  %268 = vmatpush1.bf16.msra.mxu0 %v203
  %269 = vmatprep.subr.bf16.mxu0 %v206
  %270 = vmatpush1.bf16.msra.mxu0 %v205
  %271 = vmatprep.subr.bf16.mxu0 %v208
  %272 = vmatpush1.bf16.msra.mxu0 %v207
  %273 = vmatprep.mubr.bf16.mxu0 %v36
  %274 = vmatmul.mubr.bf16.gmra.mrb[0].mxu0 %v35
  %v275 = vpop.f32.mrb[0].mxu0
  %v276 = vadd.f32 %v74, %v275
  %v277 = vpop.f32.mrb[0].mxu0
  %v278 = vadd.f32 %v78, %v277
  %v279 = vpop.f32.mrb[0].mxu0
  %v280 = vpop.f32.mrb[0].mxu0
  %281 = vdwg.mxu0
  %v282 = vmul.f32 %v276, 0.5
  %v283 = vmul.f32 %v278, 0.5
  %v284 = vtanh.pop %v282
  %v285 = vtanh.pop %v283
  %v286 = vmul.f32 %v284, 0.5
  %v287 = vmul.f32 %v285, 0.5
  %v288 = vadd.f32 %v286, 0.5
  %v289 = vadd.f32 %v287, 0.5
  %v290 = vpack.c.bf16 %v288, %v288
  %v291 = vpack.c.bf16 %v289, %v289
  %v292 = vld [vmem:[%s3] sm:$0xff]
  %v293 = vld [vmem:[%s3 + $0x8] sm:$0xff]
  %v294 = vld [vmem:[%s3 + $0x10] sm:$0xff]
  %v295 = vld [vmem:[%s3 + $0x18] sm:$0xff]
  %v296 = vld [vmem:[%s3 + $0x20] sm:$0xff]
  %v297 = vld [vmem:[%s3 + $0x28] sm:$0xff]
  %v298 = vld [vmem:[%s3 + $0x30] sm:$0xff]
  %v299 = vld [vmem:[%s3 + $0x38] sm:$0xff]
  %v300 = vld [vmem:[%s3 + $0x40] sm:$0xff]
  %v301 = vld [vmem:[%s3 + $0x48] sm:$0xff]
  %v302 = vld [vmem:[%s3 + $0x50] sm:$0xff]
  %v303 = vld [vmem:[%s3 + $0x58] sm:$0xff]
  %v304 = vld [vmem:[%s3 + $0x60] sm:$0xff]
  %v305 = vld [vmem:[%s3 + $0x68] sm:$0xff]
  %v306 = vld [vmem:[%s3 + $0x70] sm:$0xff]
  %v307 = vld [vmem:[%s3 + $0x78] sm:$0xff]
  %v308 = vld [vmem:[%s3 + $0x80] sm:$0xff]
  %v309 = vld [vmem:[%s3 + $0x88] sm:$0xff]
  %v310 = vld [vmem:[%s3 + $0x90] sm:$0xff]
  %v311 = vld [vmem:[%s3 + $0x98] sm:$0xff]
  %v312 = vld [vmem:[%s3 + $0xa0] sm:$0xff]
  %v313 = vld [vmem:[%s3 + $0xa8] sm:$0xff]
  %v314 = vld [vmem:[%s3 + $0xb0] sm:$0xff]
  %v315 = vld [vmem:[%s3 + $0xb8] sm:$0xff]
  %v316 = vld [vmem:[%s3 + $0xc0] sm:$0xff]
  %v317 = vld [vmem:[%s3 + $0xc8] sm:$0xff]
  %v318 = vld [vmem:[%s3 + $0xd0] sm:$0xff]
  %v319 = vld [vmem:[%s3 + $0xd8] sm:$0xff]
  %v320 = vld [vmem:[%s3 + $0xe0] sm:$0xff]
  %v321 = vld [vmem:[%s3 + $0xe8] sm:$0xff]
  %v322 = vld [vmem:[%s3 + $0xf0] sm:$0xff]
  %v323 = vld [vmem:[%s3 + $0xf8] sm:$0xff]
  %v324 = vld [vmem:[%s4] sm:$0x3]
  %v326 = vlaneseq
  %v327 = vshrl.u32 %v326, 7
  %v328 = vsub.s32 0, %v327
  %v329 = vrot.slane %v324, %v328
  %v330 = vlaneseq
  %v331 = vshrl.u32 %v330, 7
  %v332 = vsub.s32 1, %v331
  %v333 = vrot.slane %v324, %v332
  %v368 = vunpack.c.l.b16 %v292
  %v369 = vunpack.c.h.b16 %v292
  %v370 = vunpack.c.l.b16 %v293
  %v371 = vunpack.c.h.b16 %v293
  %v372 = vunpack.c.l.b16 %v294
  %v373 = vunpack.c.h.b16 %v294
  %v374 = vunpack.c.l.b16 %v295
  %v375 = vunpack.c.h.b16 %v295
  %v376 = vunpack.c.l.b16 %v296
  %v377 = vunpack.c.h.b16 %v296
  %v378 = vunpack.c.l.b16 %v297
  %v379 = vunpack.c.h.b16 %v297
  %v380 = vunpack.c.l.b16 %v298
  %v381 = vunpack.c.h.b16 %v298
  %v382 = vunpack.c.l.b16 %v299
  %v383 = vunpack.c.h.b16 %v299
  %v384 = vunpack.c.l.b16 %v300
  %v385 = vunpack.c.h.b16 %v300
  %v386 = vunpack.c.l.b16 %v301
  %v387 = vunpack.c.h.b16 %v301
  %v388 = vunpack.c.l.b16 %v302
  %v389 = vunpack.c.h.b16 %v302
  %v390 = vunpack.c.l.b16 %v303
  %v391 = vunpack.c.h.b16 %v303
  %v392 = vunpack.c.l.b16 %v304
  %v393 = vunpack.c.h.b16 %v304
  %v394 = vunpack.c.l.b16 %v305
  %v395 = vunpack.c.h.b16 %v305
  %v396 = vunpack.c.l.b16 %v306
  %v397 = vunpack.c.h.b16 %v306
  %v398 = vunpack.c.l.b16 %v307
  %v399 = vunpack.c.h.b16 %v307
  %v400 = vunpack.c.l.b16 %v308
  %v401 = vunpack.c.h.b16 %v308
  %v402 = vunpack.c.l.b16 %v309
  %v403 = vunpack.c.h.b16 %v309
  %v404 = vunpack.c.l.b16 %v310
  %v405 = vunpack.c.h.b16 %v310
  %v406 = vunpack.c.l.b16 %v311
  %v407 = vunpack.c.h.b16 %v311
  %v408 = vunpack.c.l.b16 %v312
  %v409 = vunpack.c.h.b16 %v312
  %v410 = vunpack.c.l.b16 %v313
  %v411 = vunpack.c.h.b16 %v313
  %v412 = vunpack.c.l.b16 %v314
  %v413 = vunpack.c.h.b16 %v314
  %v414 = vunpack.c.l.b16 %v315
  %v415 = vunpack.c.h.b16 %v315
  %v416 = vunpack.c.l.b16 %v316
  %v417 = vunpack.c.h.b16 %v316
  %v418 = vunpack.c.l.b16 %v317
  %v419 = vunpack.c.h.b16 %v317
  %v420 = vunpack.c.l.b16 %v318
  %v421 = vunpack.c.h.b16 %v318
  %v422 = vunpack.c.l.b16 %v319
  %v423 = vunpack.c.h.b16 %v319
  %v424 = vunpack.c.l.b16 %v320
  %v425 = vunpack.c.h.b16 %v320
  %v426 = vunpack.c.l.b16 %v321
  %v427 = vunpack.c.h.b16 %v321
  %v428 = vunpack.c.l.b16 %v322
  %v429 = vunpack.c.h.b16 %v322
  %v430 = vunpack.c.l.b16 %v323
  %v431 = vunpack.c.h.b16 %v323
  %v432 = vpack.c.b16 %v370, %v368
  %v433 = vpack.c.b16 %v371, %v369
  %v434 = vpack.c.b16 %v374, %v372
  %v435 = vpack.c.b16 %v375, %v373
  %v436 = vpack.c.b16 %v378, %v376
  %v437 = vpack.c.b16 %v379, %v377
  %v438 = vpack.c.b16 %v382, %v380
  %v439 = vpack.c.b16 %v383, %v381
  %v440 = vpack.c.b16 %v386, %v384
  %v441 = vpack.c.b16 %v387, %v385
  %v442 = vpack.c.b16 %v390, %v388
  %v443 = vpack.c.b16 %v391, %v389
  %v444 = vpack.c.b16 %v394, %v392
  %v445 = vpack.c.b16 %v395, %v393
  %v446 = vpack.c.b16 %v398, %v396
  %v447 = vpack.c.b16 %v399, %v397
  %v448 = vpack.c.b16 %v402, %v400
  %v449 = vpack.c.b16 %v403, %v401
  %v450 = vpack.c.b16 %v406, %v404
  %v451 = vpack.c.b16 %v407, %v405
  %v452 = vpack.c.b16 %v410, %v408
  %v453 = vpack.c.b16 %v411, %v409
  %v454 = vpack.c.b16 %v414, %v412
  %v455 = vpack.c.b16 %v415, %v413
  %v456 = vpack.c.b16 %v418, %v416
  %v457 = vpack.c.b16 %v419, %v417
  %v458 = vpack.c.b16 %v422, %v420
  %v459 = vpack.c.b16 %v423, %v421
  %v460 = vpack.c.b16 %v426, %v424
  %v461 = vpack.c.b16 %v427, %v425
  %v462 = vpack.c.b16 %v430, %v428
  %v463 = vpack.c.b16 %v431, %v429
  %496 = vmatprep.subr.bf16.mxu0 %v433
  %497 = vmatpush1.bf16.msra.mxu0 %v432
  %498 = vmatprep.subr.bf16.mxu0 %v435
  %499 = vmatpush1.bf16.msra.mxu0 %v434
  %500 = vmatprep.subr.bf16.mxu0 %v437
  %501 = vmatpush1.bf16.msra.mxu0 %v436
  %502 = vmatprep.subr.bf16.mxu0 %v439
  %503 = vmatpush1.bf16.msra.mxu0 %v438
  %504 = vmatprep.subr.bf16.mxu0 %v441
  %505 = vmatpush1.bf16.msra.mxu0 %v440
  %506 = vmatprep.subr.bf16.mxu0 %v443
  %507 = vmatpush1.bf16.msra.mxu0 %v442
  %508 = vmatprep.subr.bf16.mxu0 %v445
  %509 = vmatpush1.bf16.msra.mxu0 %v444
  %510 = vmatprep.subr.bf16.mxu0 %v447
  %511 = vmatpush1.bf16.msra.mxu0 %v446
  %512 = vmatprep.subr.bf16.mxu0 %v449
  %513 = vmatpush1.bf16.msra.mxu0 %v448
  %514 = vmatprep.subr.bf16.mxu0 %v451
  %515 = vmatpush1.bf16.msra.mxu0 %v450
  %516 = vmatprep.subr.bf16.mxu0 %v453
  %517 = vmatpush1.bf16.msra.mxu0 %v452
  %518 = vmatprep.subr.bf16.mxu0 %v455
  %519 = vmatpush1.bf16.msra.mxu0 %v454
  %520 = vmatprep.subr.bf16.mxu0 %v457
  %521 = vmatpush1.bf16.msra.mxu0 %v456
  %522 = vmatprep.subr.bf16.mxu0 %v459
  %523 = vmatpush1.bf16.msra.mxu0 %v458
  %524 = vmatprep.subr.bf16.mxu0 %v461
  %525 = vmatpush1.bf16.msra.mxu0 %v460
  %526 = vmatprep.subr.bf16.mxu0 %v463
  %527 = vmatpush1.bf16.msra.mxu0 %v462
  %528 = vmatprep.mubr.bf16.mxu0 %v291
  %529 = vmatmul.mubr.bf16.gmra.mrb[0].mxu0 %v290
  %v530 = vpop.f32.mrb[0].mxu0
  %v531 = vadd.f32 %v329, %v530
  %v532 = vpop.f32.mrb[0].mxu0
  %v533 = vadd.f32 %v333, %v532
  %v534 = vpop.f32.mrb[0].mxu0
  %v535 = vpop.f32.mrb[0].mxu0
  %536 = vdwg.mxu0
  %v537 = vmul.f32 %v531, 0.5
  %v538 = vmul.f32 %v533, 0.5
  %v539 = vtanh.pop %v537
  %v540 = vtanh.pop %v538
  %v541 = vmul.f32 %v539, 0.5
  %v542 = vmul.f32 %v540, 0.5
  %v543 = vadd.f32 %v541, 0.5
  %v544 = vadd.f32 %v542, 0.5
  %v545 = vpack.c.bf16 %v543, %v543
  %v546 = vpack.c.bf16 %v544, %v544
  %v547 = vld [vmem:[%s5] sm:$0xff]
  %v548 = vld [vmem:[%s5 + $0x8] sm:$0xff]
  %v549 = vld [vmem:[%s5 + $0x10] sm:$0xff]
  %v550 = vld [vmem:[%s5 + $0x18] sm:$0xff]
  %v551 = vld [vmem:[%s5 + $0x20] sm:$0xff]
  %v552 = vld [vmem:[%s5 + $0x28] sm:$0xff]
  %v553 = vld [vmem:[%s5 + $0x30] sm:$0xff]
  %v554 = vld [vmem:[%s5 + $0x38] sm:$0xff]
  %v555 = vld [vmem:[%s5 + $0x40] sm:$0xff]
  %v556 = vld [vmem:[%s5 + $0x48] sm:$0xff]
  %v557 = vld [vmem:[%s5 + $0x50] sm:$0xff]
  %v558 = vld [vmem:[%s5 + $0x58] sm:$0xff]
  %v559 = vld [vmem:[%s5 + $0x60] sm:$0xff]
  %v560 = vld [vmem:[%s5 + $0x68] sm:$0xff]
  %v561 = vld [vmem:[%s5 + $0x70] sm:$0xff]
  %v562 = vld [vmem:[%s5 + $0x78] sm:$0xff]
  %v563 = vld [vmem:[%s5 + $0x80] sm:$0xff]
  %v564 = vld [vmem:[%s5 + $0x88] sm:$0xff]
  %v565 = vld [vmem:[%s5 + $0x90] sm:$0xff]
  %v566 = vld [vmem:[%s5 + $0x98] sm:$0xff]
  %v567 = vld [vmem:[%s5 + $0xa0] sm:$0xff]
  %v568 = vld [vmem:[%s5 + $0xa8] sm:$0xff]
  %v569 = vld [vmem:[%s5 + $0xb0] sm:$0xff]
  %v570 = vld [vmem:[%s5 + $0xb8] sm:$0xff]
  %v571 = vld [vmem:[%s5 + $0xc0] sm:$0xff]
  %v572 = vld [vmem:[%s5 + $0xc8] sm:$0xff]
  %v573 = vld [vmem:[%s5 + $0xd0] sm:$0xff]
  %v574 = vld [vmem:[%s5 + $0xd8] sm:$0xff]
  %v575 = vld [vmem:[%s5 + $0xe0] sm:$0xff]
  %v576 = vld [vmem:[%s5 + $0xe8] sm:$0xff]
  %v577 = vld [vmem:[%s5 + $0xf0] sm:$0xff]
  %v578 = vld [vmem:[%s5 + $0xf8] sm:$0xff]
  %v579 = vld [vmem:[%s6] sm:$0x3]
  %v581 = vlaneseq
  %v582 = vshrl.u32 %v581, 7
  %v583 = vsub.s32 0, %v582
  %v584 = vrot.slane %v579, %v583
  %v585 = vlaneseq
  %v586 = vshrl.u32 %v585, 7
  %v587 = vsub.s32 1, %v586
  %v588 = vrot.slane %v579, %v587
  %v623 = vunpack.c.l.b16 %v547
  %v624 = vunpack.c.h.b16 %v547
  %v625 = vunpack.c.l.b16 %v548
  %v626 = vunpack.c.h.b16 %v548
  %v627 = vunpack.c.l.b16 %v549
  %v628 = vunpack.c.h.b16 %v549
  %v629 = vunpack.c.l.b16 %v550
  %v630 = vunpack.c.h.b16 %v550
  %v631 = vunpack.c.l.b16 %v551
  %v632 = vunpack.c.h.b16 %v551
  %v633 = vunpack.c.l.b16 %v552
  %v634 = vunpack.c.h.b16 %v552
  %v635 = vunpack.c.l.b16 %v553
  %v636 = vunpack.c.h.b16 %v553
  %v637 = vunpack.c.l.b16 %v554
  %v638 = vunpack.c.h.b16 %v554
  %v639 = vunpack.c.l.b16 %v555
  %v640 = vunpack.c.h.b16 %v555
  %v641 = vunpack.c.l.b16 %v556
  %v642 = vunpack.c.h.b16 %v556
  %v643 = vunpack.c.l.b16 %v557
  %v644 = vunpack.c.h.b16 %v557
  %v645 = vunpack.c.l.b16 %v558
  %v646 = vunpack.c.h.b16 %v558
  %v647 = vunpack.c.l.b16 %v559
  %v648 = vunpack.c.h.b16 %v559
  %v649 = vunpack.c.l.b16 %v560
  %v650 = vunpack.c.h.b16 %v560
  %v651 = vunpack.c.l.b16 %v561
  %v652 = vunpack.c.h.b16 %v561
  %v653 = vunpack.c.l.b16 %v562
  %v654 = vunpack.c.h.b16 %v562
  %v655 = vunpack.c.l.b16 %v563
  %v656 = vunpack.c.h.b16 %v563
  %v657 = vunpack.c.l.b16 %v564
  %v658 = vunpack.c.h.b16 %v564
  %v659 = vunpack.c.l.b16 %v565
  %v660 = vunpack.c.h.b16 %v565
  %v661 = vunpack.c.l.b16 %v566
  %v662 = vunpack.c.h.b16 %v566
  %v663 = vunpack.c.l.b16 %v567
  %v664 = vunpack.c.h.b16 %v567
  %v665 = vunpack.c.l.b16 %v568
  %v666 = vunpack.c.h.b16 %v568
  %v667 = vunpack.c.l.b16 %v569
  %v668 = vunpack.c.h.b16 %v569
  %v669 = vunpack.c.l.b16 %v570
  %v670 = vunpack.c.h.b16 %v570
  %v671 = vunpack.c.l.b16 %v571
  %v672 = vunpack.c.h.b16 %v571
  %v673 = vunpack.c.l.b16 %v572
  %v674 = vunpack.c.h.b16 %v572
  %v675 = vunpack.c.l.b16 %v573
  %v676 = vunpack.c.h.b16 %v573
  %v677 = vunpack.c.l.b16 %v574
  %v678 = vunpack.c.h.b16 %v574
  %v679 = vunpack.c.l.b16 %v575
  %v680 = vunpack.c.h.b16 %v575
  %v681 = vunpack.c.l.b16 %v576
  %v682 = vunpack.c.h.b16 %v576
  %v683 = vunpack.c.l.b16 %v577
  %v684 = vunpack.c.h.b16 %v577
  %v685 = vunpack.c.l.b16 %v578
  %v686 = vunpack.c.h.b16 %v578
  %v687 = vpack.c.b16 %v625, %v623
  %v688 = vpack.c.b16 %v626, %v624
  %v689 = vpack.c.b16 %v629, %v627
  %v690 = vpack.c.b16 %v630, %v628
  %v691 = vpack.c.b16 %v633, %v631
  %v692 = vpack.c.b16 %v634, %v632
  %v693 = vpack.c.b16 %v637, %v635
  %v694 = vpack.c.b16 %v638, %v636
  %v695 = vpack.c.b16 %v641, %v639
  %v696 = vpack.c.b16 %v642, %v640
  %v697 = vpack.c.b16 %v645, %v643
  %v698 = vpack.c.b16 %v646, %v644
  %v699 = vpack.c.b16 %v649, %v647
  %v700 = vpack.c.b16 %v650, %v648
  %v701 = vpack.c.b16 %v653, %v651
  %v702 = vpack.c.b16 %v654, %v652
  %v703 = vpack.c.b16 %v657, %v655
  %v704 = vpack.c.b16 %v658, %v656
  %v705 = vpack.c.b16 %v661, %v659
  %v706 = vpack.c.b16 %v662, %v660
  %v707 = vpack.c.b16 %v665, %v663
  %v708 = vpack.c.b16 %v666, %v664
  %v709 = vpack.c.b16 %v669, %v667
  %v710 = vpack.c.b16 %v670, %v668
  %v711 = vpack.c.b16 %v673, %v671
  %v712 = vpack.c.b16 %v674, %v672
  %v713 = vpack.c.b16 %v677, %v675
  %v714 = vpack.c.b16 %v678, %v676
  %v715 = vpack.c.b16 %v681, %v679
  %v716 = vpack.c.b16 %v682, %v680
  %v717 = vpack.c.b16 %v685, %v683
  %v718 = vpack.c.b16 %v686, %v684
  %751 = vmatprep.subr.bf16.mxu0 %v688
  %752 = vmatpush1.bf16.msra.mxu0 %v687
  %753 = vmatprep.subr.bf16.mxu0 %v690
  %754 = vmatpush1.bf16.msra.mxu0 %v689
  %755 = vmatprep.subr.bf16.mxu0 %v692
  %756 = vmatpush1.bf16.msra.mxu0 %v691
  %757 = vmatprep.subr.bf16.mxu0 %v694
  %758 = vmatpush1.bf16.msra.mxu0 %v693
  %759 = vmatprep.subr.bf16.mxu0 %v696
  %760 = vmatpush1.bf16.msra.mxu0 %v695
  %761 = vmatprep.subr.bf16.mxu0 %v698
  %762 = vmatpush1.bf16.msra.mxu0 %v697
  %763 = vmatprep.subr.bf16.mxu0 %v700
  %764 = vmatpush1.bf16.msra.mxu0 %v699
  %765 = vmatprep.subr.bf16.mxu0 %v702
  %766 = vmatpush1.bf16.msra.mxu0 %v701
  %767 = vmatprep.subr.bf16.mxu0 %v704
  %768 = vmatpush1.bf16.msra.mxu0 %v703
  %769 = vmatprep.subr.bf16.mxu0 %v706
  %770 = vmatpush1.bf16.msra.mxu0 %v705
  %771 = vmatprep.subr.bf16.mxu0 %v708
  %772 = vmatpush1.bf16.msra.mxu0 %v707
  %773 = vmatprep.subr.bf16.mxu0 %v710
  %774 = vmatpush1.bf16.msra.mxu0 %v709
  %775 = vmatprep.subr.bf16.mxu0 %v712
  %776 = vmatpush1.bf16.msra.mxu0 %v711
  %777 = vmatprep.subr.bf16.mxu0 %v714
  %778 = vmatpush1.bf16.msra.mxu0 %v713
  %779 = vmatprep.subr.bf16.mxu0 %v716
  %780 = vmatpush1.bf16.msra.mxu0 %v715
  %781 = vmatprep.subr.bf16.mxu0 %v718
  %782 = vmatpush1.bf16.msra.mxu0 %v717
  %783 = vmatprep.mubr.bf16.mxu0 %v546
  %784 = vmatmul.mubr.bf16.gmra.mrb[0].mxu0 %v545
  %v785 = vpop.f32.mrb[0].mxu0
  %v786 = vadd.f32 %v584, %v785
  %v787 = vpop.f32.mrb[0].mxu0
  %v788 = vadd.f32 %v588, %v787
  %v789 = vpop.f32.mrb[0].mxu0
  %v790 = vpop.f32.mrb[0].mxu0
  %791 = vdwg.mxu0
  %v792 = vmul.f32 %v786, 0.5
  %v793 = vmul.f32 %v788, 0.5
  %v794 = vtanh.pop %v792
  %v795 = vtanh.pop %v793
  %v796 = vmul.f32 %v794, 0.5
  %v797 = vmul.f32 %v795, 0.5
  %v798 = vadd.f32 %v796, 0.5
  %v799 = vadd.f32 %v797, 0.5
  %v800 = vpack.c.bf16 %v798, %v798
  %v801 = vpack.c.bf16 %v799, %v799
  %v802 = vld [vmem:[%s7] sm:$0xf]
  %v803 = vld [vmem:[%s7 + $0x4] sm:$0xf]
  %v804 = vld [vmem:[%s7 + $0x8] sm:$0xf]
  %v805 = vld [vmem:[%s7 + $0xc] sm:$0xf]
  %v806 = vld [vmem:[%s7 + $0x10] sm:$0xf]
  %v807 = vld [vmem:[%s7 + $0x14] sm:$0xf]
  %v808 = vld [vmem:[%s7 + $0x18] sm:$0xf]
  %v809 = vld [vmem:[%s7 + $0x1c] sm:$0xf]
  %v810 = vld [vmem:[%s7 + $0x20] sm:$0xf]
  %v811 = vld [vmem:[%s7 + $0x24] sm:$0xf]
  %v812 = vld [vmem:[%s7 + $0x28] sm:$0xf]
  %v813 = vld [vmem:[%s7 + $0x2c] sm:$0xf]
  %v814 = vld [vmem:[%s7 + $0x30] sm:$0xf]
  %v815 = vld [vmem:[%s7 + $0x34] sm:$0xf]
  %v816 = vld [vmem:[%s7 + $0x38] sm:$0xf]
  %v817 = vld [vmem:[%s7 + $0x3c] sm:$0xf]
  %v818 = vld [vmem:[%s7 + $0x40] sm:$0xf]
  %v819 = vld [vmem:[%s7 + $0x44] sm:$0xf]
  %v820 = vld [vmem:[%s7 + $0x48] sm:$0xf]
  %v821 = vld [vmem:[%s7 + $0x4c] sm:$0xf]
  %v822 = vld [vmem:[%s7 + $0x50] sm:$0xf]
  %v823 = vld [vmem:[%s7 + $0x54] sm:$0xf]
  %v824 = vld [vmem:[%s7 + $0x58] sm:$0xf]
  %v825 = vld [vmem:[%s7 + $0x5c] sm:$0xf]
  %v826 = vld [vmem:[%s7 + $0x60] sm:$0xf]
  %v827 = vld [vmem:[%s7 + $0x64] sm:$0xf]
  %v828 = vld [vmem:[%s7 + $0x68] sm:$0xf]
  %v829 = vld [vmem:[%s7 + $0x6c] sm:$0xf]
  %v830 = vld [vmem:[%s7 + $0x70] sm:$0xf]
  %v831 = vld [vmem:[%s7 + $0x74] sm:$0xf]
  %v832 = vld [vmem:[%s7 + $0x78] sm:$0xf]
  %v833 = vld [vmem:[%s7 + $0x7c] sm:$0xf]
  %v834 = vld [vmem:[%s8] sm:$0x1]
  %v836 = vlaneseq
  %v837 = vshrl.u32 %v836, 7
  %v838 = vsub.s32 0, %v837
  %v839 = vrot.slane %v834, %v838
  %v873 = vunpack.c.l.b16 %v802
  %v874 = vunpack.c.l.b16 %v803
  %v875 = vunpack.c.l.b16 %v804
  %v876 = vunpack.c.l.b16 %v805
  %v877 = vunpack.c.l.b16 %v806
  %v878 = vunpack.c.l.b16 %v807
  %v879 = vunpack.c.l.b16 %v808
  %v880 = vunpack.c.l.b16 %v809
  %v881 = vunpack.c.l.b16 %v810
  %v882 = vunpack.c.l.b16 %v811
  %v883 = vunpack.c.l.b16 %v812
  %v884 = vunpack.c.l.b16 %v813
  %v885 = vunpack.c.l.b16 %v814
  %v886 = vunpack.c.l.b16 %v815
  %v887 = vunpack.c.l.b16 %v816
  %v888 = vunpack.c.l.b16 %v817
  %v889 = vunpack.c.l.b16 %v818
  %v890 = vunpack.c.l.b16 %v819
  %v891 = vunpack.c.l.b16 %v820
  %v892 = vunpack.c.l.b16 %v821
  %v893 = vunpack.c.l.b16 %v822
  %v894 = vunpack.c.l.b16 %v823
  %v895 = vunpack.c.l.b16 %v824
  %v896 = vunpack.c.l.b16 %v825
  %v897 = vunpack.c.l.b16 %v826
  %v898 = vunpack.c.l.b16 %v827
  %v899 = vunpack.c.l.b16 %v828
  %v900 = vunpack.c.l.b16 %v829
  %v901 = vunpack.c.l.b16 %v830
  %v902 = vunpack.c.l.b16 %v831
  %v903 = vunpack.c.l.b16 %v832
  %v904 = vunpack.c.l.b16 %v833
  %v905 = vpack.c.b16 %v874, %v873
  %v906 = vpack.c.b16 %v876, %v875
  %v907 = vpack.c.b16 %v878, %v877
  %v908 = vpack.c.b16 %v880, %v879
  %v909 = vpack.c.b16 %v882, %v881
  %v910 = vpack.c.b16 %v884, %v883
  %v911 = vpack.c.b16 %v886, %v885
  %v912 = vpack.c.b16 %v888, %v887
  %v913 = vpack.c.b16 %v890, %v889
  %v914 = vpack.c.b16 %v892, %v891
  %v915 = vpack.c.b16 %v894, %v893
  %v916 = vpack.c.b16 %v896, %v895
  %v917 = vpack.c.b16 %v898, %v897
  %v918 = vpack.c.b16 %v900, %v899
  %v919 = vpack.c.b16 %v902, %v901
  %v920 = vpack.c.b16 %v904, %v903
  %937 = vmatprep.subr.bf16.mxu0 0
  %938 = vmatpush1.bf16.msra.mxu0 %v905
  %939 = vmatprep.subr.bf16.mxu0 0
  %940 = vmatpush1.bf16.msra.mxu0 %v906
  %941 = vmatprep.subr.bf16.mxu0 0
  %942 = vmatpush1.bf16.msra.mxu0 %v907
  %943 = vmatprep.subr.bf16.mxu0 0
  %944 = vmatpush1.bf16.msra.mxu0 %v908
  %945 = vmatprep.subr.bf16.mxu0 0
  %946 = vmatpush1.bf16.msra.mxu0 %v909
  %947 = vmatprep.subr.bf16.mxu0 0
  %948 = vmatpush1.bf16.msra.mxu0 %v910
  %949 = vmatprep.subr.bf16.mxu0 0
  %950 = vmatpush1.bf16.msra.mxu0 %v911
  %951 = vmatprep.subr.bf16.mxu0 0
  %952 = vmatpush1.bf16.msra.mxu0 %v912
  %953 = vmatprep.subr.bf16.mxu0 0
  %954 = vmatpush1.bf16.msra.mxu0 %v913
  %955 = vmatprep.subr.bf16.mxu0 0
  %956 = vmatpush1.bf16.msra.mxu0 %v914
  %957 = vmatprep.subr.bf16.mxu0 0
  %958 = vmatpush1.bf16.msra.mxu0 %v915
  %959 = vmatprep.subr.bf16.mxu0 0
  %960 = vmatpush1.bf16.msra.mxu0 %v916
  %961 = vmatprep.subr.bf16.mxu0 0
  %962 = vmatpush1.bf16.msra.mxu0 %v917
  %963 = vmatprep.subr.bf16.mxu0 0
  %964 = vmatpush1.bf16.msra.mxu0 %v918
  %965 = vmatprep.subr.bf16.mxu0 0
  %966 = vmatpush1.bf16.msra.mxu0 %v919
  %967 = vmatprep.subr.bf16.mxu0 0
  %968 = vmatpush1.bf16.msra.mxu0 %v920
  %969 = vmatprep.mubr.bf16.mxu0 %v801
  %970 = vmatmul.mubr.bf16.gmra.mrb[0].mxu0 %v800
  %v971 = vpop.f32.mrb[0].mxu0
  %v972 = vadd.f32 %v839, %v971
  %v973 = vpop.f32.mrb[0].mxu0
  %v974 = vpop.f32.mrb[0].mxu0
  %v975 = vpop.f32.mrb[0].mxu0
  %976 = vdwg.mxu0
  %v977 = vmul.f32 %v972, 0.5
  %v978 = vtanh.pop %v977
  %v979 = vmul.f32 %v978, 0.5
  %v980 = vadd.f32 %v979, 0.5
  %vm981 = vcmask 523264
  %982 = vst.msk [vmem:[%s9] sm:$0xff] %vm981, %v980
  // Predicated region
  $region38: #{_siglin_net_impl.1} parent=0 // pred_check
    _
  $region39: #{_siglin_net_impl.1} parent=0 // pred_check_branch
    %984 = sbr.rel (0) target = $region41
  $region40: #{_siglin_net_impl.1} parent=0 // pred_region
    _
  $region41: #{_siglin_net_impl.1} parent=0 // pred_fallthru
    _
  // Predicated region
  $region42: #{_siglin_net_impl.1} parent=0 // pred_check
    _
  $region43: #{_siglin_net_impl.1} parent=0 // pred_check_branch
    %986 = sbr.rel (0) target = $region45
  $region44: #{_siglin_net_impl.1} parent=0 // pred_region
    _
  $region45: #{_siglin_net_impl.1} parent=0 // pred_fallthru
    _

</llo_original>
